<compile_context>
chip_gen: v7x
topology: tpu7x:2x2x1
jax: 0.10.0
libtpu: 0.0.40
codegen_flags: <defaults>
</compile_context>

<pallas_src>
import functools

import jax
import jax.numpy as jnp
from jax.experimental import pallas as pl
from jax.experimental.pallas import tpu as pltpu


def _round_up(x, m):
    return ((x + m - 1) // m) * m


def dueling_q_kernel(xT_ref, w1_ref, b1_ref, w2_ref, b2_ref, wh_ref, bh_ref,
                     outT_ref):
    """Transposed forward: every activation is (features, TB) with TB on lanes."""
    xT = xT_ref[...]                                             # (S, TB)

    # fc1 + relu : (fc1, S) @ (S, TB) -> (fc1, TB)
    h1 = jnp.dot(w1_ref[...], xT, preferred_element_type=jnp.float32) + b1_ref[...]
    h1 = jnp.maximum(h1, 0.0)

    # fc2 + relu : (fc2, fc1) @ (fc1, TB) -> (fc2, TB)
    h2 = jnp.dot(w2_ref[...], h1, preferred_element_type=jnp.float32) + b2_ref[...]
    h2 = jnp.maximum(h2, 0.0)

    # fused value|advantage head : (1+A, fc2) @ (fc2, TB) -> (1+A, TB)
    y = jnp.dot(wh_ref[...], h2, preferred_element_type=jnp.float32) + bh_ref[...]

    v = y[0:1, :]                                                # (1, TB)
    a = y[1:, :]                                                 # (A, TB)

    action_size = a.shape[0]
    # PyTorch expression V + A - mean(A)/A == V + A - sum(A) * (1/A^2),
    # with the scale folded into a single compile-time constant.
    scale = 1.0 / float(action_size * action_size)
    a_sum = jnp.sum(a, axis=0, keepdims=True)                    # XLU cross-sublane reduce

    outT_ref[...] = v + a - a_sum * scale


@functools.partial(jax.jit, static_argnames=("block_b",))
def dueling_q_forward(state, params, *, block_b=1024):
    """state: (B, state_size) f32.  params: dict from init_params (PyTorch layout)."""
    B, state_size = state.shape
    fc1_units = params["w1"].shape[0]
    fc2_units = params["w2"].shape[0]
    head_out = params["wh"].shape[0]          # 1 + action_size
    action_size = head_out - 1

    # Batch tile: lane-dense (multiple of 128), capped by block_b, covers B.
    tb = max(128, min(_round_up(block_b, 128), _round_up(B, 128)))
    b_pad = _round_up(B, tb)
    grid = (pl.cdiv(b_pad, tb),)

    # Lane-dense, transposed input; pad only if the batch isn't tile-aligned.
    xT = state.T                                                 # (S, B)
    if b_pad != B:
        xT = jnp.pad(xT, ((0, 0), (0, b_pad - B)))               # (S, B_pad)

    weight_bytes = 4 * (fc1_units * (state_size + 1)
                        + fc2_units * (fc1_units + 1)
                        + head_out * (fc2_units + 1))
    cost = pl.CostEstimate(
        flops=2 * b_pad * (state_size * fc1_units
                           + fc1_units * fc2_units
                           + fc2_units * head_out),
        transcendentals=0,
        bytes_accessed=4 * b_pad * (state_size + action_size) + weight_bytes,
    )

    full = lambda arr: pl.BlockSpec(arr.shape, lambda i: (0, 0))

    outT = pl.pallas_call(
        dueling_q_kernel,
        out_shape=jax.ShapeDtypeStruct((action_size, b_pad), jnp.float32),
        grid=grid,
        in_specs=[
            pl.BlockSpec((state_size, tb), lambda i: (0, i)),    # x^T : batch-tiled
            full(params["w1"]), full(params["b1"]),              # weights resident
            full(params["w2"]), full(params["b2"]),
            full(params["wh"]), full(params["bh"]),
        ],
        out_specs=pl.BlockSpec((action_size, tb), lambda i: (0, i)),
        compiler_params=pltpu.CompilerParams(
            dimension_semantics=("parallel",)),                  # megacore on v7x
        cost_estimate=cost,
    )(xT, params["w1"], params["b1"], params["w2"], params["b2"],
      params["wh"], params["bh"])

    if b_pad != B:
        outT = outT[:, :B]
    return outT.T                                                # back to (B, A)


def init_params(key, state_size, action_size, fc1_units=64, fc2_units=64):
    """PyTorch-Linear-style uniform init, kept in (out_features, in_features) layout.

    The value and advantage heads are fused into wh/bh with the value row first.
    """
    ks = jax.random.split(key, 8)

    def linear(kw, kb, fan_in, fan_out):
        bound = 1.0 / float(fan_in) ** 0.5
        w = jax.random.uniform(kw, (fan_out, fan_in), jnp.float32, -bound, bound)
        b = jax.random.uniform(kb, (fan_out, 1), jnp.float32, -bound, bound)
        return w, b

    w1, b1 = linear(ks[0], ks[1], state_size, fc1_units)
    w2, b2 = linear(ks[2], ks[3], fc1_units, fc2_units)
    wv, bv = linear(ks[4], ks[5], fc2_units, 1)
    wa, ba = linear(ks[6], ks[7], fc2_units, action_size)
    wh = jnp.concatenate([wv, wa], axis=0)   # (1 + A, fc2)
    bh = jnp.concatenate([bv, ba], axis=0)   # (1 + A, 1)
    return {"w1": w1, "b1": b1, "w2": w2, "b2": b2, "wh": wh, "bh": bh}


def reference_forward(state, params):
    """Pure-JAX reference (same PyTorch operator-precedence semantics)."""
    h1 = jax.nn.relu(state @ params["w1"].T + params["b1"].T)
    h2 = jax.nn.relu(h1 @ params["w2"].T + params["b2"].T)
    y = h2 @ params["wh"].T + params["bh"].T
    v, a = y[:, :1], y[:, 1:]
    action_size = a.shape[1]
    return v + a - jnp.mean(a, axis=1, keepdims=True) / action_size


if __name__ == "__main__":
    key = jax.random.PRNGKey(0)
    k_param, k_state1, k_state2 = jax.random.split(key, 3)

    state_size = 8
    action_size = 4
    params = init_params(k_param, state_size, action_size)

    # Small case (B=2): single grid step, padded to one 128-lane tile.
    batch = 2
    state = jax.random.normal(k_state1, (batch, state_size), jnp.float32)
    out = jax.block_until_ready(dueling_q_forward(state, params))
    ref = reference_forward(state, params)
    assert out.shape == (batch, action_size)
    assert jnp.allclose(out, ref, atol=1e-5, rtol=1e-5), (out, ref)

    # Multi-tile case (B not a multiple of the tile) to exercise the grid
    # pipeline and the trailing-pad handling.
    batch2 = 300
    state2 = jax.random.normal(k_state2, (batch2, state_size), jnp.float32)
    out2 = jax.block_until_ready(dueling_q_forward(state2, params, block_b=128))
    ref2 = reference_forward(state2, params)
    assert out2.shape == (batch2, action_size)
    assert jnp.allclose(out2, ref2, atol=1e-5, rtol=1e-5)

    # Tile-aligned case (no pad path), exercises the single-DMA resident weights
    # across multiple parallel grid steps.
    batch3 = 256
    state3 = jax.random.normal(k_state2, (batch3, state_size), jnp.float32)
    out3 = jax.block_until_ready(dueling_q_forward(state3, params, block_b=128))
    ref3 = reference_forward(state3, params)
    assert out3.shape == (batch3, action_size)
    assert jnp.allclose(out3, ref3, atol=1e-5, rtol=1e-5)

    print("KERNEL_OK")
</pallas_src>

<mosaic_0001>
module attributes {stable_mosaic.version = 11 : i64} {
  func.func @dueling_q_kernel(%arg0: i32, %arg1: memref<8x128xf32, #tpu.memory_space<vmem>>, %arg2: memref<64x8xf32, #tpu.memory_space<vmem>>, %arg3: memref<64x1xf32, #tpu.memory_space<vmem>>, %arg4: memref<64x64xf32, #tpu.memory_space<vmem>>, %arg5: memref<64x1xf32, #tpu.memory_space<vmem>>, %arg6: memref<5x64xf32, #tpu.memory_space<vmem>>, %arg7: memref<5x1xf32, #tpu.memory_space<vmem>>, %arg8: memref<4x128xf32, #tpu.memory_space<vmem>>) attributes {dimension_semantics = [#tpu.dimension_semantics<parallel>], iteration_bounds = array<i64: 1>, scalar_prefetch = 0 : i64, scratch_operands = 0 : i64, tpu.core_type = #tpu.core_type<tc>, window_params = [{transform_indices = @transform_0, window_bounds = array<i64: 8, 128>}, {pipeline_mode = #tpu.pipeline_mode<synchronous>, transform_indices = @transform_1, window_bounds = array<i64: 64, 8>}, {pipeline_mode = #tpu.pipeline_mode<synchronous>, transform_indices = @transform_2, window_bounds = array<i64: 64, 1>}, {pipeline_mode = #tpu.pipeline_mode<synchronous>, transform_indices = @transform_3, window_bounds = array<i64: 64, 64>}, {pipeline_mode = #tpu.pipeline_mode<synchronous>, transform_indices = @transform_4, window_bounds = array<i64: 64, 1>}, {pipeline_mode = #tpu.pipeline_mode<synchronous>, transform_indices = @transform_5, window_bounds = array<i64: 5, 64>}, {pipeline_mode = #tpu.pipeline_mode<synchronous>, transform_indices = @transform_6, window_bounds = array<i64: 5, 1>}, {transform_indices = @transform_7, window_bounds = array<i64: 4, 128>}]} {
    %c0 = arith.constant 0 : index
    %c0_0 = arith.constant 0 : index
    %0 = vector.load %arg1[%c0, %c0_0] : memref<8x128xf32, #tpu.memory_space<vmem>>, vector<8x128xf32>
    %c0_1 = arith.constant 0 : index
    %c0_2 = arith.constant 0 : index
    %1 = vector.load %arg2[%c0_1, %c0_2] : memref<64x8xf32, #tpu.memory_space<vmem>>, vector<64x8xf32>
    %cst = arith.constant dense<0.000000e+00> : vector<64x128xf32>
    %2 = tpu.matmul %1, %0, %cst {dimension_numbers = #tpu.dot_dimension_numbers<[1], [0], [0], [1], [0, 0, 1, 1], [], []>} : vector<64x8xf32>, vector<8x128xf32>, vector<64x128xf32> -> vector<64x128xf32>
    %c0_3 = arith.constant 0 : index
    %c0_4 = arith.constant 0 : index
    %3 = vector.load %arg3[%c0_3, %c0_4] : memref<64x1xf32, #tpu.memory_space<vmem>>, vector<64x1xf32>
    %4 = vector.broadcast %3 : vector<64x1xf32> to vector<64x128xf32>
    %5 = arith.addf %2, %4 : vector<64x128xf32>
    %cst_5 = arith.constant 0.000000e+00 : f32
    %6 = vector.broadcast %cst_5 : f32 to vector<64x128xf32>
    %7 = arith.maximumf %5, %6 : vector<64x128xf32>
    %c0_6 = arith.constant 0 : index
    %c0_7 = arith.constant 0 : index
    %8 = vector.load %arg4[%c0_6, %c0_7] : memref<64x64xf32, #tpu.memory_space<vmem>>, vector<64x64xf32>
    %cst_8 = arith.constant dense<0.000000e+00> : vector<64x128xf32>
    %9 = tpu.matmul %8, %7, %cst_8 {dimension_numbers = #tpu.dot_dimension_numbers<[1], [0], [0], [1], [0, 0, 1, 1], [], []>} : vector<64x64xf32>, vector<64x128xf32>, vector<64x128xf32> -> vector<64x128xf32>
    %c0_9 = arith.constant 0 : index
    %c0_10 = arith.constant 0 : index
    %10 = vector.load %arg5[%c0_9, %c0_10] : memref<64x1xf32, #tpu.memory_space<vmem>>, vector<64x1xf32>
    %11 = vector.broadcast %10 : vector<64x1xf32> to vector<64x128xf32>
    %12 = arith.addf %9, %11 : vector<64x128xf32>
    %cst_11 = arith.constant 0.000000e+00 : f32
    %13 = vector.broadcast %cst_11 : f32 to vector<64x128xf32>
    %14 = arith.maximumf %12, %13 : vector<64x128xf32>
    %c0_12 = arith.constant 0 : index
    %c0_13 = arith.constant 0 : index
    %15 = vector.load %arg6[%c0_12, %c0_13] : memref<5x64xf32, #tpu.memory_space<vmem>>, vector<5x64xf32>
    %cst_14 = arith.constant dense<0.000000e+00> : vector<5x128xf32>
    %16 = tpu.matmul %15, %14, %cst_14 {dimension_numbers = #tpu.dot_dimension_numbers<[1], [0], [0], [1], [0, 0, 1, 1], [], []>} : vector<5x64xf32>, vector<64x128xf32>, vector<5x128xf32> -> vector<5x128xf32>
    %c0_15 = arith.constant 0 : index
    %c0_16 = arith.constant 0 : index
    %17 = vector.load %arg7[%c0_15, %c0_16] : memref<5x1xf32, #tpu.memory_space<vmem>>, vector<5x1xf32>
    %18 = vector.broadcast %17 : vector<5x1xf32> to vector<5x128xf32>
    %19 = arith.addf %16, %18 : vector<5x128xf32>
    %20 = vector.extract_strided_slice %19 {offsets = [0, 0], sizes = [1, 128], strides = [1, 1]} : vector<5x128xf32> to vector<1x128xf32>
    %21 = vector.extract_strided_slice %19 {offsets = [1, 0], sizes = [4, 128], strides = [1, 1]} : vector<5x128xf32> to vector<4x128xf32>
    %cst_17 = arith.constant dense<0.000000e+00> : vector<128xf32>
    %22 = vector.multi_reduction <add>, %21, %cst_17 [0] : vector<4x128xf32> to vector<128xf32>
    %23 = vector.shape_cast %22 : vector<128xf32> to vector<1x128xf32>
    %24 = vector.broadcast %20 : vector<1x128xf32> to vector<4x128xf32>
    %25 = arith.addf %24, %21 : vector<4x128xf32>
    %cst_18 = arith.constant 6.250000e-02 : f32
    %26 = vector.broadcast %cst_18 : f32 to vector<1x128xf32>
    %27 = arith.mulf %23, %26 : vector<1x128xf32>
    %28 = vector.broadcast %27 : vector<1x128xf32> to vector<4x128xf32>
    %29 = arith.subf %25, %28 : vector<4x128xf32>
    %c0_19 = arith.constant 0 : index
    %c0_20 = arith.constant 0 : index
    %30 = vector.load %arg8[%c0_19, %c0_20] : memref<4x128xf32, #tpu.memory_space<vmem>>, vector<4x128xf32>
    tpu.vector_store %arg8[%c0_19, %c0_20], %29 {strides = array<i32>} : memref<4x128xf32, #tpu.memory_space<vmem>>, vector<4x128xf32>,
    return
  }
  func.func @transform_0(%arg0: i32) -> (i32, i32) {
    %c0_i32 = arith.constant 0 : i32
    %c0_i32_0 = arith.constant 0 : i32
    return %c0_i32, %arg0 : i32, i32
  }
  func.func @transform_1(%arg0: i32) -> (i32, i32) {
    %c0_i32 = arith.constant 0 : i32
    %c0_i32_0 = arith.constant 0 : i32
    %c0_i32_1 = arith.constant 0 : i32
    return %c0_i32, %c0_i32_0 : i32, i32
  }
  func.func @transform_2(%arg0: i32) -> (i32, i32) {
    %c0_i32 = arith.constant 0 : i32
    %c0_i32_0 = arith.constant 0 : i32
    %c0_i32_1 = arith.constant 0 : i32
    return %c0_i32, %c0_i32_0 : i32, i32
  }
  func.func @transform_3(%arg0: i32) -> (i32, i32) {
    %c0_i32 = arith.constant 0 : i32
    %c0_i32_0 = arith.constant 0 : i32
    %c0_i32_1 = arith.constant 0 : i32
    return %c0_i32, %c0_i32_0 : i32, i32
  }
  func.func @transform_4(%arg0: i32) -> (i32, i32) {
    %c0_i32 = arith.constant 0 : i32
    %c0_i32_0 = arith.constant 0 : i32
    %c0_i32_1 = arith.constant 0 : i32
    return %c0_i32, %c0_i32_0 : i32, i32
  }
  func.func @transform_5(%arg0: i32) -> (i32, i32) {
    %c0_i32 = arith.constant 0 : i32
    %c0_i32_0 = arith.constant 0 : i32
    %c0_i32_1 = arith.constant 0 : i32
    return %c0_i32, %c0_i32_0 : i32, i32
  }
  func.func @transform_6(%arg0: i32) -> (i32, i32) {
    %c0_i32 = arith.constant 0 : i32
    %c0_i32_0 = arith.constant 0 : i32
    %c0_i32_1 = arith.constant 0 : i32
    return %c0_i32, %c0_i32_0 : i32, i32
  }
  func.func @transform_7(%arg0: i32) -> (i32, i32) {
    %c0_i32 = arith.constant 0 : i32
    %c0_i32_0 = arith.constant 0 : i32
    return %c0_i32, %arg0 : i32, i32
  }
}

</mosaic_0001>

<llo_original>
// kernel: dueling_q_forward.1
$region0: #{dueling_q_forward.1}
  #allocation0 [shape = 'u32[]', space=smem, size = 0x4, offset = 0x4, fixed_abs, tag = 'smem constant byte address 0x4 - core index']
  #allocation1 [shape = 'u32[144,128]{1,0:T(1,128)}', space=vmem, size = 0x12000, scoped, tag = 'internal scratch']
  %s0 = inlined_call_operand.vmem [shape: f32[8,128], index: 0, kind: input, shape index: {}]
  %s1 = inlined_call_operand.vmem [shape: f32[64,8], index: 1, kind: input, shape index: {}]
  %s2 = inlined_call_operand.vmem [shape: f32[64,1], index: 2, kind: input, shape index: {}]
  %s3 = inlined_call_operand.vmem [shape: f32[64,64], index: 3, kind: input, shape index: {}]
  %s4 = inlined_call_operand.vmem [shape: f32[64,1], index: 4, kind: input, shape index: {}]
  %s5 = inlined_call_operand.vmem [shape: f32[5,64], index: 5, kind: input, shape index: {}]
  %s6 = inlined_call_operand.vmem [shape: f32[5,1], index: 6, kind: input, shape index: {}]
  %s7 = inlined_call_operand.vmem [shape: f32[4,128], index: 7, kind: output, shape index: {}]
  %s8 = sld [smem:[#allocation0]]
  $region38: #{dueling_q_forward.1} parent=0
    _
  %s10 = ssub.s32 1, %s8
  %s11 = scalar_select 0, %s10, %s8
  // Predicated region
  $region2: #{dueling_q_forward.1} parent=0 // pred_check
    _
  $region3: #{dueling_q_forward.1} parent=0 // pred_check_branch
    %13 = sbr.rel (0) target = $region5
  $region4: #{dueling_q_forward.1} parent=0 // pred_region
    _
  $region5: #{dueling_q_forward.1} parent=0 // pred_fallthru
    _
  // Predicated region
  $region6: #{dueling_q_forward.1} parent=0 // pred_check
    _
  $region7: #{dueling_q_forward.1} parent=0 // pred_check_branch
    %15 = sbr.rel (0) target = $region9
  $region8: #{dueling_q_forward.1} parent=0 // pred_region
    _
  $region9: #{dueling_q_forward.1} parent=0 // pred_fallthru
    _
  // Predicated region
  $region10: #{dueling_q_forward.1} parent=0 // pred_check
    _
  $region11: #{dueling_q_forward.1} parent=0 // pred_check_branch
    %17 = sbr.rel (0) target = $region13
  $region12: #{dueling_q_forward.1} parent=0 // pred_region
    _
  $region13: #{dueling_q_forward.1} parent=0 // pred_fallthru
    _
  // Predicated region
  $region14: #{dueling_q_forward.1} parent=0 // pred_check
    _
  $region15: #{dueling_q_forward.1} parent=0 // pred_check_branch
    %19 = sbr.rel (0) target = $region17
  $region16: #{dueling_q_forward.1} parent=0 // pred_region
    _
  $region17: #{dueling_q_forward.1} parent=0 // pred_fallthru
    _
  // Predicated region
  $region18: #{dueling_q_forward.1} parent=0 // pred_check
    _
  $region19: #{dueling_q_forward.1} parent=0 // pred_check_branch
    %21 = sbr.rel (0) target = $region21
  $region20: #{dueling_q_forward.1} parent=0 // pred_region
    _
  $region21: #{dueling_q_forward.1} parent=0 // pred_fallthru
    _
  // Predicated region
  $region22: #{dueling_q_forward.1} parent=0 // pred_check
    _
  $region23: #{dueling_q_forward.1} parent=0 // pred_check_branch
    %23 = sbr.rel (0) target = $region25
  $region24: #{dueling_q_forward.1} parent=0 // pred_region
    _
  $region25: #{dueling_q_forward.1} parent=0 // pred_fallthru
    _
  // Predicated region
  $region26: #{dueling_q_forward.1} parent=0 // pred_check
    _
  $region27: #{dueling_q_forward.1} parent=0 // pred_check_branch
    %25 = sbr.rel (0) target = $region29
  $region28: #{dueling_q_forward.1} parent=0 // pred_region
    _
  $region29: #{dueling_q_forward.1} parent=0 // pred_fallthru
    _
  %v26 = vld [vmem:[%s0] sm:$0xff]
  %v27 = vld [vmem:[%s1] sm:$0xff]
  %v28 = vld [vmem:[%s1 + $0x8] sm:$0xff]
  %v29 = vld [vmem:[%s1 + $0x10] sm:$0xff]
  %v30 = vld [vmem:[%s1 + $0x18] sm:$0xff]
  %v31 = vld [vmem:[%s1 + $0x20] sm:$0xff]
  %v32 = vld [vmem:[%s1 + $0x28] sm:$0xff]
  %v33 = vld [vmem:[%s1 + $0x30] sm:$0xff]
  %v34 = vld [vmem:[%s1 + $0x38] sm:$0xff]
  %v35 = vld [vmem:[%s2] sm:$0xff]
  %v36 = vld [vmem:[%s2 + $0x8] sm:$0xff]
  %v37 = vld [vmem:[%s2 + $0x10] sm:$0xff]
  %v38 = vld [vmem:[%s2 + $0x18] sm:$0xff]
  %v39 = vld [vmem:[%s2 + $0x20] sm:$0xff]
  %v40 = vld [vmem:[%s2 + $0x28] sm:$0xff]
  %v41 = vld [vmem:[%s2 + $0x30] sm:$0xff]
  %v42 = vld [vmem:[%s2 + $0x38] sm:$0xff]
  %44 = vset.pattern.permute.xlu0 0
  %45 = vperm.xlu0 %44, %v35
  %v46 = vpop.permute.xlu0 %45
  %49 = vset.pattern.permute.xlu0 0
  %50 = vperm.xlu0 %49, %v36
  %v51 = vpop.permute.xlu0 %50
  %54 = vset.pattern.permute.xlu0 0
  %55 = vperm.xlu0 %54, %v37
  %v56 = vpop.permute.xlu0 %55
  %59 = vset.pattern.permute.xlu0 0
  %60 = vperm.xlu0 %59, %v38
  %v61 = vpop.permute.xlu0 %60
  %64 = vset.pattern.permute.xlu0 0
  %65 = vperm.xlu0 %64, %v39
  %v66 = vpop.permute.xlu0 %65
  %69 = vset.pattern.permute.xlu0 0
  %70 = vperm.xlu0 %69, %v40
  %v71 = vpop.permute.xlu0 %70
  %74 = vset.pattern.permute.xlu0 0
  %75 = vperm.xlu0 %74, %v41
  %v76 = vpop.permute.xlu0 %75
  %79 = vset.pattern.permute.xlu0 0
  %80 = vperm.xlu0 %79, %v42
  %v81 = vpop.permute.xlu0 %80
  %vm83 = vcmask 64512
  %v85 = vsel %vm83, %v27, 0
  %v88 = vsel %vm83, %v28, 0
  %v91 = vsel %vm83, %v29, 0
  %v94 = vsel %vm83, %v30, 0
  %v97 = vsel %vm83, %v31, 0
  %v100 = vsel %vm83, %v32, 0
  %v103 = vsel %vm83, %v33, 0
  %v106 = vsel %vm83, %v34, 0
  %108 = vmatprep.subr.mxu0 0.0
  %109 = vmatpush1.msra.mxu0 %v26
  %110 = vmatprep.subr.mxu0 0.0
  %111 = vmatpush1.msra.mxu0 0.0
  %112 = vmatprep.subr.mxu0 0.0
  %113 = vmatpush1.msra.mxu0 0.0
  %114 = vmatprep.subr.mxu0 0.0
  %115 = vmatpush1.msra.mxu0 0.0
  %116 = vmatprep.subr.mxu0 0.0
  %117 = vmatpush1.msra.mxu0 0.0
  %118 = vmatprep.subr.mxu0 0.0
  %119 = vmatpush1.msra.mxu0 0.0
  %120 = vmatprep.subr.mxu0 0.0
  %121 = vmatpush1.msra.mxu0 0.0
  %122 = vmatprep.subr.mxu0 0.0
  %123 = vmatpush1.msra.mxu0 0.0
  %124 = vmatprep.subr.mxu0 0.0
  %125 = vmatpush1.msra.mxu0 0.0
  %126 = vmatprep.subr.mxu0 0.0
  %127 = vmatpush1.msra.mxu0 0.0
  %128 = vmatprep.subr.mxu0 0.0
  %129 = vmatpush1.msra.mxu0 0.0
  %130 = vmatprep.subr.mxu0 0.0
  %131 = vmatpush1.msra.mxu0 0.0
  %132 = vmatprep.subr.mxu0 0.0
  %133 = vmatpush1.msra.mxu0 0.0
  %134 = vmatprep.subr.mxu0 0.0
  %135 = vmatpush1.msra.mxu0 0.0
  %136 = vmatprep.subr.mxu0 0.0
  %137 = vmatpush1.msra.mxu0 0.0
  %138 = vmatprep.subr.mxu0 0.0
  %139 = vmatpush1.msra.mxu0 0.0
  %140 = vmatprep.subr.mxu0 0.0
  %141 = vmatpush1.msra.mxu0 0.0
  %142 = vmatprep.subr.mxu0 0.0
  %143 = vmatpush1.msra.mxu0 0.0
  %144 = vmatprep.subr.mxu0 0.0
  %145 = vmatpush1.msra.mxu0 0.0
  %146 = vmatprep.subr.mxu0 0.0
  %147 = vmatpush1.msra.mxu0 0.0
  %148 = vmatprep.subr.mxu0 0.0
  %149 = vmatpush1.msra.mxu0 0.0
  %150 = vmatprep.subr.mxu0 0.0
  %151 = vmatpush1.msra.mxu0 0.0
  %152 = vmatprep.subr.mxu0 0.0
  %153 = vmatpush1.msra.mxu0 0.0
  %154 = vmatprep.subr.mxu0 0.0
  %155 = vmatpush1.msra.mxu0 0.0
  %156 = vmatprep.subr.mxu0 0.0
  %157 = vmatpush1.msra.mxu0 0.0
  %158 = vmatprep.subr.mxu0 0.0
  %159 = vmatpush1.msra.mxu0 0.0
  %160 = vmatprep.subr.mxu0 0.0
  %161 = vmatpush1.msra.mxu0 0.0
  %162 = vmatprep.subr.mxu0 0.0
  %163 = vmatpush1.msra.mxu0 0.0
  %164 = vmatprep.subr.mxu0 0.0
  %165 = vmatpush1.msra.mxu0 0.0
  %166 = vmatprep.subr.mxu0 0.0
  %167 = vmatpush1.msra.mxu0 0.0
  %168 = vmatprep.subr.mxu0 0.0
  %169 = vmatpush1.msra.mxu0 0.0
  %170 = vmatprep.subr.mxu0 0.0
  %171 = vmatpush1.msra.mxu0 0.0
  %172 = vmatprep.mubr.f32.mxu0 0.0
  %173 = vmatmul.mubr.f32.gmra.mrb[0].mxu0 %v85
  %v174 = vpop.f32.mrb[0].mxu0
  %v175 = vadd.f32 %v46, %v174
  %v176 = vpop.f32.mrb[0].mxu0
  %177 = vmatprep.mubr.f32.mxu0 0.0
  %178 = vmatmul.mubr.f32.gmra.mrb[0].mxu0 %v88
  %v179 = vpop.f32.mrb[0].mxu0
  %v180 = vadd.f32 %v51, %v179
  %v181 = vpop.f32.mrb[0].mxu0
  %182 = vmatprep.mubr.f32.mxu0 0.0
  %183 = vmatmul.mubr.f32.gmra.mrb[0].mxu0 %v91
  %v184 = vpop.f32.mrb[0].mxu0
  %v185 = vadd.f32 %v56, %v184
  %v186 = vpop.f32.mrb[0].mxu0
  %187 = vmatprep.mubr.f32.mxu0 0.0
  %188 = vmatmul.mubr.f32.gmra.mrb[0].mxu0 %v94
  %v189 = vpop.f32.mrb[0].mxu0
  %v190 = vadd.f32 %v61, %v189
  %v191 = vpop.f32.mrb[0].mxu0
  %192 = vmatprep.mubr.f32.mxu0 0.0
  %193 = vmatmul.mubr.f32.gmra.mrb[0].mxu0 %v97
  %v194 = vpop.f32.mrb[0].mxu0
  %v195 = vadd.f32 %v66, %v194
  %v196 = vpop.f32.mrb[0].mxu0
  %197 = vmatprep.mubr.f32.mxu0 0.0
  %198 = vmatmul.mubr.f32.gmra.mrb[0].mxu0 %v100
  %v199 = vpop.f32.mrb[0].mxu0
  %v200 = vadd.f32 %v71, %v199
  %v201 = vpop.f32.mrb[0].mxu0
  %202 = vmatprep.mubr.f32.mxu0 0.0
  %203 = vmatmul.mubr.f32.gmra.mrb[0].mxu0 %v103
  %v204 = vpop.f32.mrb[0].mxu0
  %v205 = vadd.f32 %v76, %v204
  %v206 = vpop.f32.mrb[0].mxu0
  %207 = vmatprep.mubr.f32.mxu0 0.0
  %208 = vmatmul.mubr.f32.gmra.mrb[0].mxu0 %v106
  %v209 = vpop.f32.mrb[0].mxu0
  %v210 = vadd.f32 %v81, %v209
  %v211 = vpop.f32.mrb[0].mxu0
  %212 = vdwg.mxu0
  %v213 = vmax.f32 %v175, 0.0
  %v214 = vmax.f32 %v180, 0.0
  %v215 = vmax.f32 %v185, 0.0
  %v216 = vmax.f32 %v190, 0.0
  %v217 = vmax.f32 %v195, 0.0
  %v218 = vmax.f32 %v200, 0.0
  %v219 = vmax.f32 %v205, 0.0
  %v220 = vmax.f32 %v210, 0.0
  %v221 = vld [vmem:[%s3] sm:$0xff]
  %v222 = vld [vmem:[%s3 + $0x8] sm:$0xff]
  %v223 = vld [vmem:[%s3 + $0x10] sm:$0xff]
  %v224 = vld [vmem:[%s3 + $0x18] sm:$0xff]
  %v225 = vld [vmem:[%s3 + $0x20] sm:$0xff]
  %v226 = vld [vmem:[%s3 + $0x28] sm:$0xff]
  %v227 = vld [vmem:[%s3 + $0x30] sm:$0xff]
  %v228 = vld [vmem:[%s3 + $0x38] sm:$0xff]
  %v229 = vld [vmem:[%s4] sm:$0xff]
  %v230 = vld [vmem:[%s4 + $0x8] sm:$0xff]
  %v231 = vld [vmem:[%s4 + $0x10] sm:$0xff]
  %v232 = vld [vmem:[%s4 + $0x18] sm:$0xff]
  %v233 = vld [vmem:[%s4 + $0x20] sm:$0xff]
  %v234 = vld [vmem:[%s4 + $0x28] sm:$0xff]
  %v235 = vld [vmem:[%s4 + $0x30] sm:$0xff]
  %v236 = vld [vmem:[%s4 + $0x38] sm:$0xff]
  %238 = vset.pattern.permute.xlu0 0
  %239 = vperm.xlu0 %238, %v229
  %v240 = vpop.permute.xlu0 %239
  %243 = vset.pattern.permute.xlu0 0
  %244 = vperm.xlu0 %243, %v230
  %v245 = vpop.permute.xlu0 %244
  %248 = vset.pattern.permute.xlu0 0
  %249 = vperm.xlu0 %248, %v231
  %v250 = vpop.permute.xlu0 %249
  %253 = vset.pattern.permute.xlu0 0
  %254 = vperm.xlu0 %253, %v232
  %v255 = vpop.permute.xlu0 %254
  %258 = vset.pattern.permute.xlu0 0
  %259 = vperm.xlu0 %258, %v233
  %v260 = vpop.permute.xlu0 %259
  %263 = vset.pattern.permute.xlu0 0
  %264 = vperm.xlu0 %263, %v234
  %v265 = vpop.permute.xlu0 %264
  %268 = vset.pattern.permute.xlu0 0
  %269 = vperm.xlu0 %268, %v235
  %v270 = vpop.permute.xlu0 %269
  %273 = vset.pattern.permute.xlu0 0
  %274 = vperm.xlu0 %273, %v236
  %v275 = vpop.permute.xlu0 %274
  %vm277 = vcmask 523264
  %v279 = vsel %vm277, %v221, 0
  %v282 = vsel %vm277, %v222, 0
  %v285 = vsel %vm277, %v223, 0
  %v288 = vsel %vm277, %v224, 0
  %v291 = vsel %vm277, %v225, 0
  %v294 = vsel %vm277, %v226, 0
  %v297 = vsel %vm277, %v227, 0
  %v300 = vsel %vm277, %v228, 0
  %302 = vmatprep.subr.mxu0 0.0
  %303 = vmatpush1.msra.mxu0 %v213
  %304 = vmatprep.subr.mxu0 0.0
  %305 = vmatpush1.msra.mxu0 %v214
  %306 = vmatprep.subr.mxu0 0.0
  %307 = vmatpush1.msra.mxu0 %v215
  %308 = vmatprep.subr.mxu0 0.0
  %309 = vmatpush1.msra.mxu0 %v216
  %310 = vmatprep.subr.mxu0 0.0
  %311 = vmatpush1.msra.mxu0 %v217
  %312 = vmatprep.subr.mxu0 0.0
  %313 = vmatpush1.msra.mxu0 %v218
  %314 = vmatprep.subr.mxu0 0.0
  %315 = vmatpush1.msra.mxu0 %v219
  %316 = vmatprep.subr.mxu0 0.0
  %317 = vmatpush1.msra.mxu0 %v220
  %318 = vmatprep.subr.mxu0 0.0
  %319 = vmatpush1.msra.mxu0 0.0
  %320 = vmatprep.subr.mxu0 0.0
  %321 = vmatpush1.msra.mxu0 0.0
  %322 = vmatprep.subr.mxu0 0.0
  %323 = vmatpush1.msra.mxu0 0.0
  %324 = vmatprep.subr.mxu0 0.0
  %325 = vmatpush1.msra.mxu0 0.0
  %326 = vmatprep.subr.mxu0 0.0
  %327 = vmatpush1.msra.mxu0 0.0
  %328 = vmatprep.subr.mxu0 0.0
  %329 = vmatpush1.msra.mxu0 0.0
  %330 = vmatprep.subr.mxu0 0.0
  %331 = vmatpush1.msra.mxu0 0.0
  %332 = vmatprep.subr.mxu0 0.0
  %333 = vmatpush1.msra.mxu0 0.0
  %334 = vmatprep.subr.mxu0 0.0
  %335 = vmatpush1.msra.mxu0 0.0
  %336 = vmatprep.subr.mxu0 0.0
  %337 = vmatpush1.msra.mxu0 0.0
  %338 = vmatprep.subr.mxu0 0.0
  %339 = vmatpush1.msra.mxu0 0.0
  %340 = vmatprep.subr.mxu0 0.0
  %341 = vmatpush1.msra.mxu0 0.0
  %342 = vmatprep.subr.mxu0 0.0
  %343 = vmatpush1.msra.mxu0 0.0
  %344 = vmatprep.subr.mxu0 0.0
  %345 = vmatpush1.msra.mxu0 0.0
  %346 = vmatprep.subr.mxu0 0.0
  %347 = vmatpush1.msra.mxu0 0.0
  %348 = vmatprep.subr.mxu0 0.0
  %349 = vmatpush1.msra.mxu0 0.0
  %350 = vmatprep.subr.mxu0 0.0
  %351 = vmatpush1.msra.mxu0 0.0
  %352 = vmatprep.subr.mxu0 0.0
  %353 = vmatpush1.msra.mxu0 0.0
  %354 = vmatprep.subr.mxu0 0.0
  %355 = vmatpush1.msra.mxu0 0.0
  %356 = vmatprep.subr.mxu0 0.0
  %357 = vmatpush1.msra.mxu0 0.0
  %358 = vmatprep.subr.mxu0 0.0
  %359 = vmatpush1.msra.mxu0 0.0
  %360 = vmatprep.subr.mxu0 0.0
  %361 = vmatpush1.msra.mxu0 0.0
  %362 = vmatprep.subr.mxu0 0.0
  %363 = vmatpush1.msra.mxu0 0.0
  %364 = vmatprep.subr.mxu0 0.0
  %365 = vmatpush1.msra.mxu0 0.0
  %366 = vmatprep.mubr.f32.mxu0 0.0
  %367 = vmatmul.mubr.f32.gmra.mrb[0].mxu0 %v279
  %v368 = vpop.f32.mrb[0].mxu0
  %v369 = vadd.f32 %v240, %v368
  %v370 = vpop.f32.mrb[0].mxu0
  %371 = vmatprep.mubr.f32.mxu0 0.0
  %372 = vmatmul.mubr.f32.gmra.mrb[0].mxu0 %v282
  %v373 = vpop.f32.mrb[0].mxu0
  %v374 = vadd.f32 %v245, %v373
  %v375 = vpop.f32.mrb[0].mxu0
  %376 = vmatprep.mubr.f32.mxu0 0.0
  %377 = vmatmul.mubr.f32.gmra.mrb[0].mxu0 %v285
  %v378 = vpop.f32.mrb[0].mxu0
  %v379 = vadd.f32 %v250, %v378
  %v380 = vpop.f32.mrb[0].mxu0
  %381 = vmatprep.mubr.f32.mxu0 0.0
  %382 = vmatmul.mubr.f32.gmra.mrb[0].mxu0 %v288
  %v383 = vpop.f32.mrb[0].mxu0
  %v384 = vadd.f32 %v255, %v383
  %v385 = vpop.f32.mrb[0].mxu0
  %386 = vmatprep.mubr.f32.mxu0 0.0
  %387 = vmatmul.mubr.f32.gmra.mrb[0].mxu0 %v291
  %v388 = vpop.f32.mrb[0].mxu0
  %v389 = vadd.f32 %v260, %v388
  %v390 = vpop.f32.mrb[0].mxu0
  %391 = vmatprep.mubr.f32.mxu0 0.0
  %392 = vmatmul.mubr.f32.gmra.mrb[0].mxu0 %v294
  %v393 = vpop.f32.mrb[0].mxu0
  %v394 = vadd.f32 %v265, %v393
  %v395 = vpop.f32.mrb[0].mxu0
  %396 = vmatprep.mubr.f32.mxu0 0.0
  %397 = vmatmul.mubr.f32.gmra.mrb[0].mxu0 %v297
  %v398 = vpop.f32.mrb[0].mxu0
  %v399 = vadd.f32 %v270, %v398
  %v400 = vpop.f32.mrb[0].mxu0
  %401 = vmatprep.mubr.f32.mxu0 0.0
  %402 = vmatmul.mubr.f32.gmra.mrb[0].mxu0 %v300
  %v403 = vpop.f32.mrb[0].mxu0
  %v404 = vadd.f32 %v275, %v403
  %v405 = vpop.f32.mrb[0].mxu0
  %406 = vdwg.mxu0
  %v407 = vmax.f32 %v369, 0.0
  %v408 = vmax.f32 %v374, 0.0
  %v409 = vmax.f32 %v379, 0.0
  %v410 = vmax.f32 %v384, 0.0
  %v411 = vmax.f32 %v389, 0.0
  %v412 = vmax.f32 %v394, 0.0
  %v413 = vmax.f32 %v399, 0.0
  %v414 = vmax.f32 %v404, 0.0
  %v415 = vld [vmem:[%s5] sm:$0x1f]
  %v416 = vld [vmem:[%s6] sm:$0x1f]
  %418 = vset.pattern.permute.xlu0 0
  %419 = vperm.xlu0 %418, %v416
  %v420 = vpop.permute.xlu0 %419
  %v423 = vsel %vm277, %v415, 0
  %425 = vmatprep.subr.mxu0 0.0
  %426 = vmatpush1.msra.mxu0 %v407
  %427 = vmatprep.subr.mxu0 0.0
  %428 = vmatpush1.msra.mxu0 %v408
  %429 = vmatprep.subr.mxu0 0.0
  %430 = vmatpush1.msra.mxu0 %v409
  %431 = vmatprep.subr.mxu0 0.0
  %432 = vmatpush1.msra.mxu0 %v410
  %433 = vmatprep.subr.mxu0 0.0
  %434 = vmatpush1.msra.mxu0 %v411
  %435 = vmatprep.subr.mxu0 0.0
  %436 = vmatpush1.msra.mxu0 %v412
  %437 = vmatprep.subr.mxu0 0.0
  %438 = vmatpush1.msra.mxu0 %v413
  %439 = vmatprep.subr.mxu0 0.0
  %440 = vmatpush1.msra.mxu0 %v414
  %441 = vmatprep.subr.mxu0 0.0
  %442 = vmatpush1.msra.mxu0 0.0
  %443 = vmatprep.subr.mxu0 0.0
  %444 = vmatpush1.msra.mxu0 0.0
  %445 = vmatprep.subr.mxu0 0.0
  %446 = vmatpush1.msra.mxu0 0.0
  %447 = vmatprep.subr.mxu0 0.0
  %448 = vmatpush1.msra.mxu0 0.0
  %449 = vmatprep.subr.mxu0 0.0
  %450 = vmatpush1.msra.mxu0 0.0
  %451 = vmatprep.subr.mxu0 0.0
  %452 = vmatpush1.msra.mxu0 0.0
  %453 = vmatprep.subr.mxu0 0.0
  %454 = vmatpush1.msra.mxu0 0.0
  %455 = vmatprep.subr.mxu0 0.0
  %456 = vmatpush1.msra.mxu0 0.0
  %457 = vmatprep.subr.mxu0 0.0
  %458 = vmatpush1.msra.mxu0 0.0
  %459 = vmatprep.subr.mxu0 0.0
  %460 = vmatpush1.msra.mxu0 0.0
  %461 = vmatprep.subr.mxu0 0.0
  %462 = vmatpush1.msra.mxu0 0.0
  %463 = vmatprep.subr.mxu0 0.0
  %464 = vmatpush1.msra.mxu0 0.0
  %465 = vmatprep.subr.mxu0 0.0
  %466 = vmatpush1.msra.mxu0 0.0
  %467 = vmatprep.subr.mxu0 0.0
  %468 = vmatpush1.msra.mxu0 0.0
  %469 = vmatprep.subr.mxu0 0.0
  %470 = vmatpush1.msra.mxu0 0.0
  %471 = vmatprep.subr.mxu0 0.0
  %472 = vmatpush1.msra.mxu0 0.0
  %473 = vmatprep.subr.mxu0 0.0
  %474 = vmatpush1.msra.mxu0 0.0
  %475 = vmatprep.subr.mxu0 0.0
  %476 = vmatpush1.msra.mxu0 0.0
  %477 = vmatprep.subr.mxu0 0.0
  %478 = vmatpush1.msra.mxu0 0.0
  %479 = vmatprep.subr.mxu0 0.0
  %480 = vmatpush1.msra.mxu0 0.0
  %481 = vmatprep.subr.mxu0 0.0
  %482 = vmatpush1.msra.mxu0 0.0
  %483 = vmatprep.subr.mxu0 0.0
  %484 = vmatpush1.msra.mxu0 0.0
  %485 = vmatprep.subr.mxu0 0.0
  %486 = vmatpush1.msra.mxu0 0.0
  %487 = vmatprep.subr.mxu0 0.0
  %488 = vmatpush1.msra.mxu0 0.0
  %489 = vmatprep.mubr.f32.mxu0 0.0
  %490 = vmatmul.mubr.f32.gmra.mrb[0].mxu0 %v423
  %v491 = vpop.f32.mrb[0].mxu0
  %v492 = vadd.f32 %v420, %v491
  %v493 = vpop.f32.mrb[0].mxu0
  %494 = vdwg.mxu0
  %v496 = vrot.slane %v492, 1
  %vm498 = vcmask 1043456
  %v499 = vsel %vm498, %v496, 0.0
  %v500 = vrot.slane %v499, 4
  %v501 = vadd.f32 %v499, %v500
  %v502 = vrot.slane %v501, 2
  %v503 = vadd.f32 %v501, %v502
  %v504 = vrot.slane %v503, 1
  %v505 = vadd.f32 %v503, %v504
  %v506 = vlaneseq
  %v507 = vshrl.u32 %v506, 7
  %v508 = vsub.s32 0, %v507
  %v509 = vrot.slane %v492, %v508
  %v510 = vadd.f32 %v509, %v492
  %v511 = vmul.f32 %v505, 0.0625
  %v512 = vsub.f32 %v510, %v511
  %513 = vst [vmem:[%s7 - $0x1] sm:$0x1e] %v512
  // Predicated region
  $region30: #{dueling_q_forward.1} parent=0 // pred_check
    _
  $region31: #{dueling_q_forward.1} parent=0 // pred_check_branch
    %515 = sbr.rel (0) target = $region33
  $region32: #{dueling_q_forward.1} parent=0 // pred_region
    _
  $region33: #{dueling_q_forward.1} parent=0 // pred_fallthru
    _
  // Predicated region
  $region34: #{dueling_q_forward.1} parent=0 // pred_check
    _
  $region35: #{dueling_q_forward.1} parent=0 // pred_check_branch
    %517 = sbr.rel (0) target = $region37
  $region36: #{dueling_q_forward.1} parent=0 // pred_region
    _
  $region37: #{dueling_q_forward.1} parent=0 // pred_fallthru
    _

</llo_original>
